<compile_context>
chip_gen: v6e
topology: v6e:2x2x1
jax: 0.10.0
libtpu: 0.0.40
codegen_flags: <defaults>
</compile_context>

<pallas_src>
import math

import jax
import jax.numpy as jnp
import numpy as np
from jax import lax
from jax.experimental import pallas as pl
from jax.experimental.pallas import tpu as pltpu


def _make_kernel(n_chunks, chunk, batch_major):
    """Build the attention kernel.

    Per-grid-step ref shapes:
      h_ref   : [tB, Dd]                      hidden tile
      e_ref   : [tB, S, De] if batch_major else [S, tB, De]
      wht_ref : [Dd, Dd]   pre-transposed hidden slice of attn.weight
      wet_ref : [De, Dd]   pre-transposed encoder slice of attn.weight
      b_ref   : [1, Dd]    attn.bias
      v_ref   : [Dd, 1]    v.weight (pre-transposed)
      o_ref   : [tB, S]    softmax(scores)
      sc_ref  : VMEM scratch, [tB, S] if batch_major else [S, tB]
    """

    def kernel(h_ref, e_ref, wht_ref, wet_ref, b_ref, v_ref, o_ref, sc_ref):
        # hidden projection + bias, once per tile: [tB, Dd] (f32)
        hid_pb = jnp.dot(h_ref[...], wht_ref[...],
                         preferred_element_type=jnp.float32) + b_ref[...]
        wet = wet_ref[...]
        v_col = v_ref[...]                                       # [Dd, 1]

        def process(c):
            start = c * chunk
            if not isinstance(start, int):
                start = pl.multiple_of(start, chunk)
            if batch_major:
                e_chunk = e_ref[:, pl.ds(start, chunk), :]       # [tB, chunk, De]
                enc_proj = lax.dot_general(                      # MXU, f32 acc
                    e_chunk, wet,
                    dimension_numbers=(((2,), (0,)), ((), ())),
                    preferred_element_type=jnp.float32)          # [tB, chunk, Dd]
                energy = jnp.tanh(enc_proj + hid_pb[:, None, :]) # EUP tanh
                s = lax.dot_general(                             # v-proj on MXU
                    energy, v_col,
                    dimension_numbers=(((2,), (0,)), ((), ())),
                    preferred_element_type=jnp.float32)[..., 0]  # [tB, chunk]
                sc_ref[:, pl.ds(start, chunk)] = s
            else:
                e_chunk = e_ref[pl.ds(start, chunk), :, :]       # [chunk, tB, De]
                enc_proj = lax.dot_general(
                    e_chunk, wet,
                    dimension_numbers=(((2,), (0,)), ((), ())),
                    preferred_element_type=jnp.float32)          # [chunk, tB, Dd]
                energy = jnp.tanh(enc_proj + hid_pb[None, :, :])
                s = lax.dot_general(
                    energy, v_col,
                    dimension_numbers=(((2,), (0,)), ((), ())),
                    preferred_element_type=jnp.float32)[..., 0]  # [chunk, tB]
                sc_ref[pl.ds(start, chunk), :] = s

        if n_chunks <= 32:
            # static unroll -> static slice offsets (LLO scheduler visibility)
            for c in range(n_chunks):
                process(c)
        else:
            @pl.loop(0, n_chunks)
            def _(c):
                process(c)

        # Softmax over src_len with S on the lane axis (lane-dense math + store).
        scores = sc_ref[...] if batch_major else sc_ref[...].T   # [tB, S]
        m = jnp.max(scores, axis=-1, keepdims=True)
        ex = jnp.exp(scores - m)
        denom = jnp.sum(ex, axis=-1, keepdims=True)
        o_ref[...] = (ex * pl.reciprocal(denom, approx=False)).astype(o_ref.dtype)

    return kernel


def _divisors_desc(n):
    ds = set()
    for i in range(1, int(math.isqrt(n)) + 1):
        if n % i == 0:
            ds.add(i)
            ds.add(n // i)
    return sorted(ds, reverse=True)


def _vmem_capacity_bytes():
    try:
        return int(pltpu.get_tpu_info().vmem_capacity_bytes)
    except Exception:
        return 64 * 1024 * 1024  # conservative fallback = v7x per-TC VMEM


def seq2seq_attention(hidden, encoder_outputs, attn_w, attn_b, v_w, *,
                      cast_to_bf16=False, force_layout=None, s_chunk_max=None):
    """Bahdanau attention forward.

    hidden:          [B, Dd]
    encoder_outputs: [S, B, De]   (torch seq-first layout)
    attn_w:          [Dd, Dd+De]  (nn.Linear weight, concat order: hidden, encoder)
    attn_b:          [Dd]
    v_w:             [1, Dd]
    Returns softmax attention weights [B, S] in f32.
    """
    S, B, De = encoder_outputs.shape
    Dd = hidden.shape[1]

    # --- parameters: split the concat-Linear and pre-transpose once -----------
    wh_t = attn_w[:, :Dd].T                                  # [Dd, Dd]
    we_t = attn_w[:, Dd:].T                                  # [De, Dd]
    bias2d = attn_b.reshape(1, Dd).astype(jnp.float32)       # [1, Dd]
    v_col = v_w.reshape(1, Dd).T.astype(jnp.float32)         # [Dd, 1]

    if cast_to_bf16:
        # bf16 encoder/hidden/weight streams, f32 accumulation in the kernel.
        hidden = hidden.astype(jnp.bfloat16)
        encoder_outputs = encoder_outputs.astype(jnp.bfloat16)
        wh_t = wh_t.astype(jnp.bfloat16)
        we_t = we_t.astype(jnp.bfloat16)

    e_item = encoder_outputs.dtype.itemsize
    h_item = hidden.dtype.itemsize
    w_item = wh_t.dtype.itemsize

    # --- generation-aware VMEM budgets ----------------------------------------
    vmem_cap = _vmem_capacity_bytes()                         # 64 MiB v7x, 128 MiB v5e/v6e
    budget = min(int(0.70 * vmem_cap), 96 * 1024 * 1024)
    inter_budget = min(4 * 1024 * 1024, budget // 4)          # per-S-chunk f32 intermediates

    # --- dtype-aware batch tiling (with optional B padding) --------------------
    step = max(8, 32 // e_item)                               # 8 f32 / 16 bf16 / 32 int8

    def footprint(tB):
        return (2 * tB * S * De * e_item                      # encoder tile (double-buffered)
                + 2 * tB * Dd * h_item                        # hidden tile
                + 2 * tB * S * 4                              # output tile
                + 2 * (Dd * Dd + De * Dd) * w_item            # weight tiles
                + 2 * 2 * Dd * 4                              # bias + v
                + tB * S * 4                                  # scores scratch
                + inter_budget)                               # bounded chunk intermediates

    B_pad = B
    if B > step and B % step != 0:
        B_pad = ((B + step - 1) // step) * step               # padding enables real tiling

    cands = [t for t in range(step, B_pad, step) if B_pad % t == 0]
    cands.append(B_pad)                                       # full dim is always legal
    fitting = [t for t in cands if footprint(t) <= budget]
    if fitting:
        if B_pad >= 16 and B_pad >= 2 * step:
            # keep >= 2 grid steps so v7x's two TensorCores both get work
            halved = [t for t in fitting if t <= B_pad // 2]
            tB = max(halved) if halved else max(fitting)
        else:
            tB = max(fitting)
    else:
        tB = min(cands)   # S-chunking still bounds the intermediates
    grid = (B_pad // tB,)

    # --- S chunking: bound live f32 intermediates to one chunk -----------------
    per_row = tB * (3 * Dd * 4 + De * max(e_item, 4))         # enc_proj + energy + e-chunk
    chunk = 1
    for d in _divisors_desc(S):
        if s_chunk_max is not None and d > s_chunk_max:
            continue
        if d * per_row <= inter_budget or d == 1:
            chunk = d
            break
    n_chunks = S // chunk

    # --- layout: zero-copy seq-first unless the strided DMA rows are tiny ------
    row_bytes = tB * De * e_item
    if force_layout is None:
        batch_major = row_bytes < 1024
    else:
        batch_major = (force_layout == "batch")

    # --- pad batch if needed (padded rows are sliced off; softmax(0s) is finite)
    if B_pad > B:
        hidden = jnp.pad(hidden, ((0, B_pad - B), (0, 0)))
        encoder_outputs = jnp.pad(encoder_outputs, ((0, 0), (0, B_pad - B), (0, 0)))

    if batch_major:
        enc_in = jnp.transpose(encoder_outputs, (1, 0, 2))    # one-time HBM pass -> [B, S, De]
        enc_spec = pl.BlockSpec((tB, S, De), lambda b: (b, 0, 0))
        scratch = pltpu.VMEM((tB, S), jnp.float32)
    else:
        enc_in = encoder_outputs                              # consumed zero-copy, seq-first
        enc_spec = pl.BlockSpec((S, tB, De), lambda b: (0, b, 0))
        scratch = pltpu.VMEM((S, tB), jnp.float32)

    # --- scoped VMEM limit from the real footprint (no blind clamp) ------------
    needed = footprint(tB) - inter_budget + chunk * per_row
    vmem_limit = int(min(max(needed + (4 << 20), 32 << 20), int(0.90 * vmem_cap)))

    # --- advisory cost estimate -------------------------------------------------
    flops = (2 * B_pad * S * De * Dd + 2 * B_pad * Dd * Dd
             + 2 * B_pad * S * Dd + 6 * B_pad * S)
    transcendentals = B_pad * S * Dd + B_pad * S
    bytes_accessed = (hidden.size * h_item + enc_in.size * e_item
                      + (Dd * Dd + De * Dd + 2 * Dd) * w_item + B_pad * S * 4)

    kernel = _make_kernel(n_chunks, chunk, batch_major)
    out = pl.pallas_call(
        kernel,
        out_shape=jax.ShapeDtypeStruct((B_pad, S), jnp.float32),
        grid_spec=pltpu.PrefetchScalarGridSpec(
            num_scalar_prefetch=0,
            grid=grid,
            in_specs=[
                pl.BlockSpec((tB, Dd), lambda b: (b, 0)),     # hidden
                enc_spec,                                     # encoder outputs
                pl.BlockSpec((Dd, Dd), lambda b: (0, 0)),     # wh_t
                pl.BlockSpec((De, Dd), lambda b: (0, 0)),     # we_t
                pl.BlockSpec((1, Dd), lambda b: (0, 0)),      # bias
                pl.BlockSpec((Dd, 1), lambda b: (0, 0)),      # v (column)
            ],
            out_specs=pl.BlockSpec((tB, S), lambda b: (b, 0)),
            scratch_shapes=[scratch],
        ),
        compiler_params=pltpu.CompilerParams(
            dimension_semantics=("parallel",),
            vmem_limit_bytes=vmem_limit,
        ),
        cost_estimate=pl.CostEstimate(
            flops=flops,
            transcendentals=transcendentals,
            bytes_accessed=bytes_accessed,
        ),
    )(hidden, enc_in, wh_t, we_t, bias2d, v_col)

    return out[:B] if B_pad > B else out


def _reference(hidden, encoder_outputs, attn_w, attn_b, v_w):
    S = encoder_outputs.shape[0]
    h_rep = jnp.repeat(hidden[:, None, :], S, axis=1)          # [B, S, Dd]
    enc = jnp.transpose(encoder_outputs, (1, 0, 2))            # [B, S, De]
    cat = jnp.concatenate([h_rep, enc], axis=2)                # [B, S, Dd+De]
    energy = jnp.tanh(cat @ attn_w.T + attn_b)                 # [B, S, Dd]
    scores = (energy @ v_w.T)[..., 0]                          # [B, S]
    return jax.nn.softmax(scores, axis=1)


if __name__ == "__main__":
    B, S, ENC_HID, DEC_HID = 2, 8, 32, 32

    key = jax.random.PRNGKey(0)
    k_h, k_e, k_w, k_b, k_v = jax.random.split(key, 5)

    hidden = jax.random.normal(k_h, (B, DEC_HID), dtype=jnp.float32)
    encoder_outputs = jax.random.normal(k_e, (S, B, ENC_HID), dtype=jnp.float32)

    fan_in_attn = ENC_HID + DEC_HID
    bound_attn = 1.0 / np.sqrt(fan_in_attn)
    attn_w = jax.random.uniform(k_w, (DEC_HID, fan_in_attn), jnp.float32,
                                -bound_attn, bound_attn)
    attn_b = jax.random.uniform(k_b, (DEC_HID,), jnp.float32, -bound_attn, bound_attn)
    bound_v = 1.0 / np.sqrt(DEC_HID)
    v_w = jax.random.uniform(k_v, (1, DEC_HID), jnp.float32, -bound_v, bound_v)

    ref = _reference(hidden, encoder_outputs, attn_w, attn_b, v_w)

    # 1) default heuristic path (tiny DMA rows -> batch-major contiguous layout)
    out = jax.block_until_ready(
        seq2seq_attention(hidden, encoder_outputs, attn_w, attn_b, v_w))
    np.testing.assert_allclose(np.asarray(out), np.asarray(ref), rtol=1e-5, atol=1e-5)

    # 2) zero-copy seq-first layout + S-chunked inner loop (exercises chunking)
    out_seq = jax.block_until_ready(
        seq2seq_attention(hidden, encoder_outputs, attn_w, attn_b, v_w,
                          force_layout="seq", s_chunk_max=4))
    np.testing.assert_allclose(np.asarray(out_seq), np.asarray(ref), rtol=1e-5, atol=1e-5)

    # 3) bf16 encoder stream (halves HBM traffic; f32 accumulation kept)
    out_bf16 = jax.block_until_ready(
        seq2seq_attention(hidden, encoder_outputs, attn_w, attn_b, v_w,
                          cast_to_bf16=True))
    np.testing.assert_allclose(np.asarray(out_bf16), np.asarray(ref),
                               rtol=5e-2, atol=5e-2)

    print("KERNEL_OK")
</pallas_src>

<mosaic_0001>
module attributes {stable_mosaic.version = 11 : i64} {
  func.func @kernel(%arg0: i32, %arg1: memref<2x32xf32, #tpu.memory_space<vmem>>, %arg2: memref<2x8x32xf32, #tpu.memory_space<vmem>>, %arg3: memref<32x32xf32, #tpu.memory_space<vmem>>, %arg4: memref<32x32xf32, #tpu.memory_space<vmem>>, %arg5: memref<1x32xf32, #tpu.memory_space<vmem>>, %arg6: memref<32x1xf32, #tpu.memory_space<vmem>>, %arg7: memref<2x8xf32, #tpu.memory_space<vmem>>, %arg8: memref<2x8xf32, #tpu.memory_space<vmem>>) attributes {dimension_semantics = [#tpu.dimension_semantics<parallel>], iteration_bounds = array<i64: 1>, scalar_prefetch = 0 : i64, scratch_operands = 1 : i64, tpu.core_type = #tpu.core_type<tc>, window_params = [{transform_indices = @transform_0, window_bounds = array<i64: 2, 32>}, {transform_indices = @transform_1, window_bounds = array<i64: 2, 8, 32>}, {pipeline_mode = #tpu.pipeline_mode<synchronous>, transform_indices = @transform_2, window_bounds = array<i64: 32, 32>}, {pipeline_mode = #tpu.pipeline_mode<synchronous>, transform_indices = @transform_3, window_bounds = array<i64: 32, 32>}, {pipeline_mode = #tpu.pipeline_mode<synchronous>, transform_indices = @transform_4, window_bounds = array<i64: 1, 32>}, {pipeline_mode = #tpu.pipeline_mode<synchronous>, transform_indices = @transform_5, window_bounds = array<i64: 32, 1>}, {transform_indices = @transform_6, window_bounds = array<i64: 2, 8>}]} {
    %c0 = arith.constant 0 : index
    %c0_0 = arith.constant 0 : index
    %0 = vector.load %arg1[%c0, %c0_0] : memref<2x32xf32, #tpu.memory_space<vmem>>, vector<2x32xf32>
    %c0_1 = arith.constant 0 : index
    %c0_2 = arith.constant 0 : index
    %1 = vector.load %arg3[%c0_1, %c0_2] : memref<32x32xf32, #tpu.memory_space<vmem>>, vector<32x32xf32>
    %cst = arith.constant dense<0.000000e+00> : vector<2x32xf32>
    %2 = tpu.matmul %0, %1, %cst {dimension_numbers = #tpu.dot_dimension_numbers<[1], [0], [0], [1], [0, 0, 1, 1], [], []>} : vector<2x32xf32>, vector<32x32xf32>, vector<2x32xf32> -> vector<2x32xf32>
    %c0_3 = arith.constant 0 : index
    %c0_4 = arith.constant 0 : index
    %3 = vector.load %arg5[%c0_3, %c0_4] : memref<1x32xf32, #tpu.memory_space<vmem>>, vector<1x32xf32>
    %4 = vector.broadcast %3 : vector<1x32xf32> to vector<2x32xf32>
    %5 = arith.addf %2, %4 : vector<2x32xf32>
    %c0_5 = arith.constant 0 : index
    %c0_6 = arith.constant 0 : index
    %6 = vector.load %arg4[%c0_5, %c0_6] : memref<32x32xf32, #tpu.memory_space<vmem>>, vector<32x32xf32>
    %c0_7 = arith.constant 0 : index
    %c0_8 = arith.constant 0 : index
    %7 = vector.load %arg6[%c0_7, %c0_8] : memref<32x1xf32, #tpu.memory_space<vmem>>, vector<32x1xf32>
    %c0_9 = arith.constant 0 : index
    %c0_10 = arith.constant 0 : index
    %c0_11 = arith.constant 0 : index
    %8 = vector.load %arg2[%c0_9, %c0_10, %c0_11] : memref<2x8x32xf32, #tpu.memory_space<vmem>>, vector<2x8x32xf32>
    %cst_12 = arith.constant dense<0.000000e+00> : vector<2x8x32xf32>
    %9 = tpu.matmul %8, %6, %cst_12 {dimension_numbers = #tpu.dot_dimension_numbers<[2], [0], [0, 1], [1], [0, 0, 0, 1, 1, 1], [], []>} : vector<2x8x32xf32>, vector<32x32xf32>, vector<2x8x32xf32> -> vector<2x8x32xf32>
    %10 = vector.shape_cast %5 : vector<2x32xf32> to vector<2x1x32xf32>
    %11 = vector.broadcast %10 : vector<2x1x32xf32> to vector<2x8x32xf32>
    %12 = arith.addf %9, %11 : vector<2x8x32xf32>
    %13 = math.tanh %12 : vector<2x8x32xf32>
    %cst_13 = arith.constant dense<0.000000e+00> : vector<2x8x1xf32>
    %14 = tpu.matmul %13, %7, %cst_13 {dimension_numbers = #tpu.dot_dimension_numbers<[2], [0], [0, 1], [1], [0, 0, 0, 1, 1, 1], [], []>} : vector<2x8x32xf32>, vector<32x1xf32>, vector<2x8x1xf32> -> vector<2x8x1xf32>
    %15 = vector.shape_cast %14 : vector<2x8x1xf32> to vector<2x8xf32>
    %c0_14 = arith.constant 0 : index
    %c0_15 = arith.constant 0 : index
    %16 = vector.load %arg8[%c0_14, %c0_15] : memref<2x8xf32, #tpu.memory_space<vmem>>, vector<2x8xf32>
    tpu.vector_store %arg8[%c0_14, %c0_15], %15 {strides = array<i32>} : memref<2x8xf32, #tpu.memory_space<vmem>>, vector<2x8xf32>,
    %c0_16 = arith.constant 0 : index
    %c0_17 = arith.constant 0 : index
    %17 = vector.load %arg8[%c0_16, %c0_17] : memref<2x8xf32, #tpu.memory_space<vmem>>, vector<2x8xf32>
    %cst_18 = arith.constant dense<0xFF800000> : vector<2xf32>
    %18 = vector.multi_reduction <maximumf>, %17, %cst_18 [1] : vector<2x8xf32> to vector<2xf32>
    %19 = vector.shape_cast %18 : vector<2xf32> to vector<2x1xf32>
    %20 = vector.broadcast %19 : vector<2x1xf32> to vector<2x8xf32>
    %21 = arith.subf %17, %20 : vector<2x8xf32>
    %22 = math.exp %21 : vector<2x8xf32>
    %cst_19 = arith.constant dense<0.000000e+00> : vector<2xf32>
    %23 = vector.multi_reduction <add>, %22, %cst_19 [1] : vector<2x8xf32> to vector<2xf32>
    %24 = vector.shape_cast %23 : vector<2xf32> to vector<2x1xf32>
    %25 = tpu.reciprocal %24 : vector<2x1xf32> -> vector<2x1xf32>
    %26 = vector.broadcast %25 : vector<2x1xf32> to vector<2x8xf32>
    %27 = arith.mulf %22, %26 : vector<2x8xf32>
    %c0_20 = arith.constant 0 : index
    %c0_21 = arith.constant 0 : index
    %28 = vector.load %arg7[%c0_20, %c0_21] : memref<2x8xf32, #tpu.memory_space<vmem>>, vector<2x8xf32>
    tpu.vector_store %arg7[%c0_20, %c0_21], %27 {strides = array<i32>} : memref<2x8xf32, #tpu.memory_space<vmem>>, vector<2x8xf32>,
    return
  }
  func.func @transform_0(%arg0: i32) -> (i32, i32) {
    %c0_i32 = arith.constant 0 : i32
    %c0_i32_0 = arith.constant 0 : i32
    return %arg0, %c0_i32 : i32, i32
  }
  func.func @transform_1(%arg0: i32) -> (i32, i32, i32) {
    %c0_i32 = arith.constant 0 : i32
    %c0_i32_0 = arith.constant 0 : i32
    %c0_i32_1 = arith.constant 0 : i32
    return %arg0, %c0_i32, %c0_i32_0 : i32, i32, i32
  }
  func.func @transform_2(%arg0: i32) -> (i32, i32) {
    %c0_i32 = arith.constant 0 : i32
    %c0_i32_0 = arith.constant 0 : i32
    %c0_i32_1 = arith.constant 0 : i32
    return %c0_i32, %c0_i32_0 : i32, i32
  }
  func.func @transform_3(%arg0: i32) -> (i32, i32) {
    %c0_i32 = arith.constant 0 : i32
    %c0_i32_0 = arith.constant 0 : i32
    %c0_i32_1 = arith.constant 0 : i32
    return %c0_i32, %c0_i32_0 : i32, i32
  }
  func.func @transform_4(%arg0: i32) -> (i32, i32) {
    %c0_i32 = arith.constant 0 : i32
    %c0_i32_0 = arith.constant 0 : i32
    %c0_i32_1 = arith.constant 0 : i32
    return %c0_i32, %c0_i32_0 : i32, i32
  }
  func.func @transform_5(%arg0: i32) -> (i32, i32) {
    %c0_i32 = arith.constant 0 : i32
    %c0_i32_0 = arith.constant 0 : i32
    %c0_i32_1 = arith.constant 0 : i32
    return %c0_i32, %c0_i32_0 : i32, i32
  }
  func.func @transform_6(%arg0: i32) -> (i32, i32) {
    %c0_i32 = arith.constant 0 : i32
    %c0_i32_0 = arith.constant 0 : i32
    return %arg0, %c0_i32 : i32, i32
  }
}

</mosaic_0001>

<llo_original>
// kernel: tpu_custom_call.1
$region0: #{tpu_custom_call.1}
  #allocation0 [shape = 'u32[]', space=smem, size = 0x4, offset = 0x4, fixed_abs, tag = 'smem constant byte address 0x4 - core index']
  #allocation1 [shape = 'u32[144,128]{1,0:T(1,128)}', space=vmem, size = 0x12000, scoped, tag = 'internal scratch']
  #allocation2 [shape = 'f32[2,8]{1,0:T(2,128)}', space=vmem, size = 0x400, scoped, tag = 'scratch operand']
  %s0 = inlined_call_operand.vmem [shape: f32[2,32], index: 0, kind: input, shape index: {}]
  %s1 = inlined_call_operand.hbm [shape: f32[2,8,32], index: 1, kind: input, shape index: {}]
  %s2 = inlined_call_operand.vmem [shape: f32[32,32], index: 2, kind: input, shape index: {}]
  %s3 = inlined_call_operand.hbm [shape: f32[32,32], index: 3, kind: input, shape index: {}]
  %s4 = inlined_call_operand.vmem [shape: f32[1,32], index: 4, kind: input, shape index: {}]
  %s5 = inlined_call_operand.vmem [shape: f32[32,1], index: 5, kind: input, shape index: {}]
  %s6 = inlined_call_operand.hbm [shape: f32[2,8], index: 6, kind: output, shape index: {}]
  %s7 = sld [smem:[#allocation0]]
  $region42: #{tpu_custom_call.1} parent=0
    _
  %s9 = ssub.s32 1, %s7
  %s10 = scalar_select 0, %s9, %s7
  $region1: #{tpu_custom_call.1} parent=0
    #allocation3 [shape = 'u8[8192]{0}', space=vmem, size = 0x2000, scoped, tag = 'input window, operand 1, single buffered']
    #allocation4 [shape = 's32[1]{0}', space=sflag, size = 0x4, scoped, tag = 'scoped memory for tpu_custom_call.1']
    #allocation5 [shape = 's32[1]{0}', space=sflag, size = 0x4, scoped, tag = 'scoped memory for tpu_custom_call.1']
    #allocation6 [shape = 'u8[16384]{0}', space=vmem, size = 0x4000, scoped, tag = 'input window, operand 3, single buffered']
    #allocation7 [shape = 's32[1]{0}', space=sflag, size = 0x4, scoped, tag = 'scoped memory for tpu_custom_call.1']
    #allocation8 [shape = 'u8[1024]{0}', space=vmem, size = 0x400, scoped, tag = 'output window, operand 0, single buffered']
    %11 = vsyncpa [#allocation4], 0
    %12 = vsyncpa [#allocation7], 0
    %13 = vsyncpa [#allocation5], 0
    // Predicated region
    $region2: #{tpu_custom_call.1} parent=1 // pred_check
      _
    $region3: #{tpu_custom_call.1} parent=1 // pred_check_branch
      %15 = sbr.rel (0) target = $region5
    $region4: #{tpu_custom_call.1} parent=1 // pred_region
      _
    $region5: #{tpu_custom_call.1} parent=1 // pred_fallthru
      _
    // Predicated region
    $region6: #{tpu_custom_call.1} parent=1 // pred_check
      _
    $region7: #{tpu_custom_call.1} parent=1 // pred_check_branch
      %17 = sbr.rel (0) target = $region9
    $region8: #{tpu_custom_call.1} parent=1 // pred_region
      %s19 = ssub.s32 256, 256
      %20 = vsyncadd [#allocation4], %s19
      %s21 = sshll.u32 [#allocation3], 4
      %s22 = int_to_ptr.vmem [resolvable:$true] %s21
      %27 = dma.hbm_to_vmem [thread:$0]  %s1, 256, %s22, [#allocation4], 128, 128, 8
    $region9: #{tpu_custom_call.1} parent=1 // pred_fallthru
      _
    // Predicated region
    $region10: #{tpu_custom_call.1} parent=1 // pred_check
      _
    $region11: #{tpu_custom_call.1} parent=1 // pred_check_branch
      %29 = sbr.rel (0) target = $region13
    $region12: #{tpu_custom_call.1} parent=1 // pred_region
      _
    $region13: #{tpu_custom_call.1} parent=1 // pred_fallthru
      _
    // Predicated region
    $region14: #{tpu_custom_call.1} parent=1 // pred_check
      _
    $region15: #{tpu_custom_call.1} parent=1 // pred_check_branch
      %31 = sbr.rel (0) target = $region17
    $region16: #{tpu_custom_call.1} parent=1 // pred_region
      %s33 = ssub.s32 512, 512
      %34 = vsyncadd [#allocation7], %s33
      %s35 = sshll.u32 [#allocation6], 4
      %s36 = int_to_ptr.vmem [resolvable:$true] %s35
      %41 = dma.hbm_to_vmem [thread:$0]  %s3, 512, %s36, [#allocation7], 128, 128, 8
    $region17: #{tpu_custom_call.1} parent=1 // pred_fallthru
      _
    // Predicated region
    $region18: #{tpu_custom_call.1} parent=1 // pred_check
      _
    $region19: #{tpu_custom_call.1} parent=1 // pred_check_branch
      %43 = sbr.rel (0) target = $region21
    $region20: #{tpu_custom_call.1} parent=1 // pred_region
      _
    $region21: #{tpu_custom_call.1} parent=1 // pred_fallthru
      _
    // Predicated region
    $region22: #{tpu_custom_call.1} parent=1 // pred_check
      _
    $region23: #{tpu_custom_call.1} parent=1 // pred_check_branch
      %45 = sbr.rel (0) target = $region25
    $region24: #{tpu_custom_call.1} parent=1 // pred_region
      _
    $region25: #{tpu_custom_call.1} parent=1 // pred_fallthru
      _
    // Predicated region
    $region26: #{tpu_custom_call.1} parent=1 // pred_check
      _
    $region27: #{tpu_custom_call.1} parent=1 // pred_check_branch
      %47 = sbr.rel (0) target = $region29
    $region28: #{tpu_custom_call.1} parent=1 // pred_region
      %48 = dma.done [#allocation4], 256
    $region29: #{tpu_custom_call.1} parent=1 // pred_fallthru
      _
    // Predicated region
    $region30: #{tpu_custom_call.1} parent=1 // pred_check
      _
    $region31: #{tpu_custom_call.1} parent=1 // pred_check_branch
      %50 = sbr.rel (0) target = $region33
    $region32: #{tpu_custom_call.1} parent=1 // pred_region
      %51 = dma.done [#allocation7], 512
    $region33: #{tpu_custom_call.1} parent=1 // pred_fallthru
      _
    %v52 = vld [vmem:[%s0] sm:$0x3]
    %v53 = vld [vmem:[%s2] sm:$0xff]
    %v54 = vld [vmem:[%s2 + $0x8] sm:$0xff]
    %v55 = vld [vmem:[%s2 + $0x10] sm:$0xff]
    %v56 = vld [vmem:[%s2 + $0x18] sm:$0xff]
    %v57 = vld [vmem:[%s4] sm:$0x1]
    %v59 = vlaneseq
    %v60 = vshrl.u32 %v59, 7
    %v61 = vsub.s32 0, %v60
    %v62 = vrot.slane %v57, %v61
    %vm64 = vcmask 261120
    %v66 = vsel %vm64, %v52, 0
    %68 = vmatprep.subr.mxu0 0.0
    %69 = vmatpush1.msra.mxu0 0.0
    %70 = vmatprep.subr.mxu0 0.0
    %71 = vmatpush1.msra.mxu0 0.0
    %72 = vmatprep.subr.mxu0 0.0
    %73 = vmatpush1.msra.mxu0 0.0
    %74 = vmatprep.subr.mxu0 0.0
    %75 = vmatpush1.msra.mxu0 0.0
    %76 = vmatprep.subr.mxu0 0.0
    %77 = vmatpush1.msra.mxu0 0.0
    %78 = vmatprep.subr.mxu0 0.0
    %79 = vmatpush1.msra.mxu0 0.0
    %80 = vmatprep.subr.mxu0 0.0
    %81 = vmatpush1.msra.mxu0 0.0
    %82 = vmatprep.subr.mxu0 0.0
    %83 = vmatpush1.msra.mxu0 0.0
    %84 = vmatprep.subr.mxu0 0.0
    %85 = vmatpush1.msra.mxu0 0.0
    %86 = vmatprep.subr.mxu0 0.0
    %87 = vmatpush1.msra.mxu0 0.0
    %88 = vmatprep.subr.mxu0 0.0
    %89 = vmatpush1.msra.mxu0 0.0
    %90 = vmatprep.subr.mxu0 0.0
    %91 = vmatpush1.msra.mxu0 0.0
    %92 = vmatprep.subr.mxu0 0.0
    %93 = vmatpush1.msra.mxu0 %v56
    %94 = vmatprep.subr.mxu0 0.0
    %95 = vmatpush1.msra.mxu0 %v55
    %96 = vmatprep.subr.mxu0 0.0
    %97 = vmatpush1.msra.mxu0 %v54
    %98 = vmatprep.subr.mxu0 0.0
    %99 = vmatpush1.msra.mxu0 %v53
    %100 = vmatprep.subr.mxu0 0.0
    %101 = vmatpush2.msra.mxu0 0.0
    %102 = vmatprep.subr.mxu0 0.0
    %103 = vmatpush2.msra.mxu0 0.0
    %104 = vmatprep.subr.mxu0 0.0
    %105 = vmatpush2.msra.mxu0 0.0
    %106 = vmatprep.subr.mxu0 0.0
    %107 = vmatpush2.msra.mxu0 0.0
    %108 = vmatprep.subr.mxu0 0.0
    %109 = vmatpush2.msra.mxu0 0.0
    %110 = vmatprep.subr.mxu0 0.0
    %111 = vmatpush2.msra.mxu0 0.0
    %112 = vmatprep.subr.mxu0 0.0
    %113 = vmatpush2.msra.mxu0 0.0
    %114 = vmatprep.subr.mxu0 0.0
    %115 = vmatpush2.msra.mxu0 0.0
    %116 = vmatprep.subr.mxu0 0.0
    %117 = vmatpush2.msra.mxu0 0.0
    %118 = vmatprep.subr.mxu0 0.0
    %119 = vmatpush2.msra.mxu0 0.0
    %120 = vmatprep.subr.mxu0 0.0
    %121 = vmatpush2.msra.mxu0 0.0
    %122 = vmatprep.subr.mxu0 0.0
    %123 = vmatpush2.msra.mxu0 0.0
    %124 = vmatprep.subr.mxu0 0.0
    %125 = vmatpush2.msra.mxu0 0.0
    %126 = vmatprep.subr.mxu0 0.0
    %127 = vmatpush2.msra.mxu0 0.0
    %128 = vmatprep.subr.mxu0 0.0
    %129 = vmatpush2.msra.mxu0 0.0
    %130 = vmatprep.subr.mxu0 0.0
    %131 = vmatpush2.msra.mxu0 0.0
    %132 = vmatprep.mubr.f32.mxu0 0.0
    %133 = vmatmul.mubr.f32.gmra.mxu0 %v66
    %v134 = vpop.f32.mrf.mxu0
    %v135 = vadd.f32 %v62, %v134
    %v136 = vpop.f32.mrf.mxu0
    %137 = vdwg.mxu0
    %v138 = vld [vmem:[#allocation6] sm:$0xff]
    %v139 = vld [vmem:[#allocation6 + $0x8] sm:$0xff]
    %v140 = vld [vmem:[#allocation6 + $0x10] sm:$0xff]
    %v141 = vld [vmem:[#allocation6 + $0x18] sm:$0xff]
    %v142 = vld [vmem:[%s5] sm:$0xff]
    %v143 = vld [vmem:[%s5 + $0x8] sm:$0xff]
    %v144 = vld [vmem:[%s5 + $0x10] sm:$0xff]
    %v145 = vld [vmem:[%s5 + $0x18] sm:$0xff]
    %v146 = vld [vmem:[#allocation3] sm:$0xff]
    %v147 = vld [vmem:[#allocation3 + $0x8] sm:$0xff]
    %v150 = vunpack.c.l.s4 1966171168
    %v151 = vunpack.c.0.s8 %v150
    %v152 = vlaneseq
    %v153 = vshrl.u32 %v152, 7
    %v154 = vsub.s32 %v151, %v153
    %v155 = vrot.slane %v135, %v154
    %v156 = vcombine.high %v155, %v155
    %v158 = vunpack.c.l.s4 1966171168
    %v159 = vunpack.c.0.s8 %v158
    %v160 = vlaneseq
    %v161 = vshrl.u32 %v160, 7
    %v162 = vsub.s32 %v159, %v161
    %v163 = vrot.slane %v155, %v162
    %v165 = vunpack.c.l.s4 1966171168
    %v166 = vunpack.c.0.s8 %v165
    %v167 = vlaneseq
    %v168 = vshrl.u32 %v167, 7
    %v169 = vsub.s32 %v166, %v168
    %v170 = vrot.slane %v156, %v169
    %v171 = vlaneseq
    %v172 = vshrl.u32 %v171, 7
    %v173 = vsub.s32 0, %v172
    %v174 = vrot.slane %v163, %v173
    %v175 = vlaneseq
    %v176 = vshrl.u32 %v175, 7
    %v177 = vsub.s32 0, %v176
    %v178 = vrot.slane %v170, %v177
    %v182 = vsel %vm64, %v146, 0
    %v185 = vsel %vm64, %v147, 0
    %187 = vmatprep.subr.mxu0 0.0
    %188 = vmatpush1.msra.mxu0 0.0
    %189 = vmatprep.subr.mxu0 0.0
    %190 = vmatpush1.msra.mxu0 0.0
    %191 = vmatprep.subr.mxu0 0.0
    %192 = vmatpush1.msra.mxu0 0.0
    %193 = vmatprep.subr.mxu0 0.0
    %194 = vmatpush1.msra.mxu0 0.0
    %195 = vmatprep.subr.mxu0 0.0
    %196 = vmatpush1.msra.mxu0 0.0
    %197 = vmatprep.subr.mxu0 0.0
    %198 = vmatpush1.msra.mxu0 0.0
    %199 = vmatprep.subr.mxu0 0.0
    %200 = vmatpush1.msra.mxu0 0.0
    %201 = vmatprep.subr.mxu0 0.0
    %202 = vmatpush1.msra.mxu0 0.0
    %203 = vmatprep.subr.mxu0 0.0
    %204 = vmatpush1.msra.mxu0 0.0
    %205 = vmatprep.subr.mxu0 0.0
    %206 = vmatpush1.msra.mxu0 0.0
    %207 = vmatprep.subr.mxu0 0.0
    %208 = vmatpush1.msra.mxu0 0.0
    %209 = vmatprep.subr.mxu0 0.0
    %210 = vmatpush1.msra.mxu0 0.0
    %211 = vmatprep.subr.mxu0 0.0
    %212 = vmatpush1.msra.mxu0 %v141
    %213 = vmatprep.subr.mxu0 0.0
    %214 = vmatpush1.msra.mxu0 %v140
    %215 = vmatprep.subr.mxu0 0.0
    %216 = vmatpush1.msra.mxu0 %v139
    %217 = vmatprep.subr.mxu0 0.0
    %218 = vmatpush1.msra.mxu0 %v138
    %219 = vmatprep.subr.mxu0 0.0
    %220 = vmatpush2.msra.mxu0 0.0
    %221 = vmatprep.subr.mxu0 0.0
    %222 = vmatpush2.msra.mxu0 0.0
    %223 = vmatprep.subr.mxu0 0.0
    %224 = vmatpush2.msra.mxu0 0.0
    %225 = vmatprep.subr.mxu0 0.0
    %226 = vmatpush2.msra.mxu0 0.0
    %227 = vmatprep.subr.mxu0 0.0
    %228 = vmatpush2.msra.mxu0 0.0
    %229 = vmatprep.subr.mxu0 0.0
    %230 = vmatpush2.msra.mxu0 0.0
    %231 = vmatprep.subr.mxu0 0.0
    %232 = vmatpush2.msra.mxu0 0.0
    %233 = vmatprep.subr.mxu0 0.0
    %234 = vmatpush2.msra.mxu0 0.0
    %235 = vmatprep.subr.mxu0 0.0
    %236 = vmatpush2.msra.mxu0 0.0
    %237 = vmatprep.subr.mxu0 0.0
    %238 = vmatpush2.msra.mxu0 0.0
    %239 = vmatprep.subr.mxu0 0.0
    %240 = vmatpush2.msra.mxu0 0.0
    %241 = vmatprep.subr.mxu0 0.0
    %242 = vmatpush2.msra.mxu0 0.0
    %243 = vmatprep.subr.mxu0 0.0
    %244 = vmatpush2.msra.mxu0 0.0
    %245 = vmatprep.subr.mxu0 0.0
    %246 = vmatpush2.msra.mxu0 0.0
    %247 = vmatprep.subr.mxu0 0.0
    %248 = vmatpush2.msra.mxu0 0.0
    %249 = vmatprep.subr.mxu0 0.0
    %250 = vmatpush2.msra.mxu0 0.0
    %251 = vmatprep.mubr.f32.mxu0 0.0
    %252 = vmatmul.mubr.f32.gmra.mxu0 %v182
    %v253 = vpop.f32.mrf.mxu0
    %v254 = vadd.f32 %v174, %v253
    %v255 = vpop.f32.mrf.mxu0
    %256 = vmatprep.mubr.f32.mxu0 0.0
    %257 = vmatmul.mubr.f32.gmra.mxu0 %v185
    %v258 = vpop.f32.mrf.mxu0
    %v259 = vadd.f32 %v178, %v258
    %v260 = vpop.f32.mrf.mxu0
    %261 = vdwg.mxu0
    %v262 = vtanh.pop %v254
    %v263 = vtanh.pop %v259
    %v265 = vsel %vm64, %v262, 0
    %v268 = vsel %vm64, %v263, 0
    %270 = vmatprep.subr.mxu0 0.0
    %271 = vmatpush1.msra.mxu0 0.0
    %272 = vmatprep.subr.mxu0 0.0
    %273 = vmatpush1.msra.mxu0 0.0
    %274 = vmatprep.subr.mxu0 0.0
    %275 = vmatpush1.msra.mxu0 0.0
    %276 = vmatprep.subr.mxu0 0.0
    %277 = vmatpush1.msra.mxu0 0.0
    %278 = vmatprep.subr.mxu0 0.0
    %279 = vmatpush1.msra.mxu0 0.0
    %280 = vmatprep.subr.mxu0 0.0
    %281 = vmatpush1.msra.mxu0 0.0
    %282 = vmatprep.subr.mxu0 0.0
    %283 = vmatpush1.msra.mxu0 0.0
    %284 = vmatprep.subr.mxu0 0.0
    %285 = vmatpush1.msra.mxu0 0.0
    %286 = vmatprep.subr.mxu0 0.0
    %287 = vmatpush1.msra.mxu0 0.0
    %288 = vmatprep.subr.mxu0 0.0
    %289 = vmatpush1.msra.mxu0 0.0
    %290 = vmatprep.subr.mxu0 0.0
    %291 = vmatpush1.msra.mxu0 0.0
    %292 = vmatprep.subr.mxu0 0.0
    %293 = vmatpush1.msra.mxu0 0.0
    %294 = vmatprep.subr.mxu0 0.0
    %295 = vmatpush1.msra.mxu0 %v145
    %296 = vmatprep.subr.mxu0 0.0
    %297 = vmatpush1.msra.mxu0 %v144
    %298 = vmatprep.subr.mxu0 0.0
    %299 = vmatpush1.msra.mxu0 %v143
    %300 = vmatprep.subr.mxu0 0.0
    %301 = vmatpush1.msra.mxu0 %v142
    %302 = vmatprep.subr.mxu0 0.0
    %303 = vmatpush2.msra.mxu0 0.0
    %304 = vmatprep.subr.mxu0 0.0
    %305 = vmatpush2.msra.mxu0 0.0
    %306 = vmatprep.subr.mxu0 0.0
    %307 = vmatpush2.msra.mxu0 0.0
    %308 = vmatprep.subr.mxu0 0.0
    %309 = vmatpush2.msra.mxu0 0.0
    %310 = vmatprep.subr.mxu0 0.0
    %311 = vmatpush2.msra.mxu0 0.0
    %312 = vmatprep.subr.mxu0 0.0
    %313 = vmatpush2.msra.mxu0 0.0
    %314 = vmatprep.subr.mxu0 0.0
    %315 = vmatpush2.msra.mxu0 0.0
    %316 = vmatprep.subr.mxu0 0.0
    %317 = vmatpush2.msra.mxu0 0.0
    %318 = vmatprep.subr.mxu0 0.0
    %319 = vmatpush2.msra.mxu0 0.0
    %320 = vmatprep.subr.mxu0 0.0
    %321 = vmatpush2.msra.mxu0 0.0
    %322 = vmatprep.subr.mxu0 0.0
    %323 = vmatpush2.msra.mxu0 0.0
    %324 = vmatprep.subr.mxu0 0.0
    %325 = vmatpush2.msra.mxu0 0.0
    %326 = vmatprep.subr.mxu0 0.0
    %327 = vmatpush2.msra.mxu0 0.0
    %328 = vmatprep.subr.mxu0 0.0
    %329 = vmatpush2.msra.mxu0 0.0
    %330 = vmatprep.subr.mxu0 0.0
    %331 = vmatpush2.msra.mxu0 0.0
    %332 = vmatprep.subr.mxu0 0.0
    %333 = vmatpush2.msra.mxu0 0.0
    %334 = vmatprep.mubr.f32.mxu0 0.0
    %335 = vmatmul.mubr.f32.gmra.mxu0 %v265
    %v336 = vpop.f32.mrf.mxu0
    %v337 = vadd.f32 0.0, %v336
    %v338 = vpop.f32.mrf.mxu0
    %339 = vmatprep.mubr.f32.mxu0 0.0
    %340 = vmatmul.mubr.f32.gmra.mxu0 %v268
    %v341 = vpop.f32.mrf.mxu0
    %v342 = vadd.f32 0.0, %v341
    %v343 = vpop.f32.mrf.mxu0
    %344 = vdwg.mxu0
    %347 = vset.pattern.permute.xlu0 0
    %348 = vperm.xlu0 %347, %v337
    %v349 = vpop.permute.xlu0 %348
    %350 = vset.pattern.permute.xlu0 0
    %351 = vperm.xlu0 %350, %v342
    %v352 = vpop.permute.xlu0 %351
    %v353 = vlaneseq
    %v354 = vand.u32 %v353, 127
    %v355 = vlaneseq
    %v356 = vshrl.u32 %v355, 7
    %v357 = vsub.s32 %v354, %v356
    %v358 = vrot.slane %v349, %v357
    %v359 = vlaneseq
    %v360 = vshrl.u32 %v359, 7
    %v361 = vsub.s32 %v354, %v360
    %v362 = vrot.slane %v352, %v361
    %vm363 = vcmask 1041409
    %v364 = vsel %vm363, %v362, %v358
    %vm366 = vcmask 58368
    %367 = vst.msk [vmem:[#allocation2] sm:$0x3] %vm366, %v364
    %v368 = vld [vmem:[#allocation2] sm:$0x3]
    %v369 = vsel %vm366, %v368, -inf
    %370 = vmax.xlane.f32.xlu0 %v369
    %v371 = vpop.xlane.xlu0 %370
    %v372 = vsub.f32 %v368, %v371
    %v373 = vmul.f32 %v372, 1.442695
    %v374 = vpow.pop %v373
    %v375 = vsel %vm366, %v374, 0.0
    %376 = vadd.xlane.f32.xlu0 %v375
    %v377 = vpop.xlane.xlu0 %376
    %v378 = vrcp.pop %v377
    %v379 = vmul.f32 %v374, %v378
    %380 = vst.msk [vmem:[#allocation8] sm:$0x3] %vm366, %v379
    // Predicated region
    $region34: #{tpu_custom_call.1} parent=1 // pred_check
      _
    $region35: #{tpu_custom_call.1} parent=1 // pred_check_branch
      %382 = sbr.rel (0) target = $region37
    $region36: #{tpu_custom_call.1} parent=1 // pred_region
      %s384 = ssub.s32 32, 32
      %385 = vsyncadd [#allocation5], %s384
      %s387 = sshll.u32 [#allocation8], 4
      %s388 = int_to_ptr.vmem [resolvable:$true] %s387
      %390 = dma.vmem_to_hbm [thread:$0]  %s388, 32, %s6, [#allocation5]
    $region37: #{tpu_custom_call.1} parent=1 // pred_fallthru
      _
    // Predicated region
    $region38: #{tpu_custom_call.1} parent=1 // pred_check
      _
    $region39: #{tpu_custom_call.1} parent=1 // pred_check_branch
      %392 = sbr.rel (0) target = $region41
    $region40: #{tpu_custom_call.1} parent=1 // pred_region
      %393 = dma.done [#allocation5], 32
    $region41: #{tpu_custom_call.1} parent=1 // pred_fallthru
      _
    %394 = vsyncpa [#allocation4], 1
    %395 = vsyncpa [#allocation7], 1
    %396 = vsyncpa [#allocation5], 1

</llo_original>
